<compile_context>
chip_gen: v5e
topology: v5e:2x2
jax: 0.10.0
libtpu: 0.0.40
codegen_flags: <defaults>
</compile_context>

<pallas_src>
import jax
import jax.numpy as jnp
import numpy as np
from jax.experimental import pallas as pl
from jax.experimental.pallas import tpu as pltpu

# --- small, forward-consistent sizes -----------------------------------------
VOCAB = 50
VOCAB_PAD = 64          # pad vocab so [one_hot | h] is exactly (B, 128) lanes
EMBED = 32
HIDDEN = 64             # 2*H = 128 -> lane-dense packed (h|c) output slab
N_LAYERS = 1
BATCH = 8


# ------------------------------- kernel --------------------------------------
def decoder_step_kernel(ids_ref, h_ref, c_ref, w_ref, b_ref, out_ref):
    """Fused embedding + single LSTM-cell step. Everything resident in VMEM.

    ids_ref: (B, 1)  int32 token ids
    h_ref  : (B, H)  f32
    c_ref  : (B, H)  f32
    w_ref  : (VOCAB_PAD + H, 4H) f32   prebaked [embed@W_ih^T ; W_hh^T]
    b_ref  : (1, 4H) f32               prebaked b_ih + b_hh
    out_ref: (B, 2H) f32               packed [h_new | c_new]
    """
    B, H = h_ref.shape
    VP = w_ref.shape[0] - H

    # one-hot(ids) built in-kernel; embedding lookup rides the fused matmul.
    lane = jax.lax.broadcasted_iota(jnp.int32, (B, VP), 1)
    onehot = (lane == ids_ref[...]).astype(jnp.float32)          # (B, VP)

    xh = jnp.concatenate([onehot, h_ref[...]], axis=1)           # (B, VP+H) = (8, 128)

    # single MXU pass: embedding + input proj + recurrent proj, f32 accumulation
    gates = (jnp.dot(xh, w_ref[...], preferred_element_type=jnp.float32)
             + b_ref[...])                                       # (B, 4H)

    # PyTorch gate order: i, f, g, o
    i_g = jax.nn.sigmoid(gates[:, 0 * H:1 * H])
    f_g = jax.nn.sigmoid(gates[:, 1 * H:2 * H])
    g_g = jnp.tanh(gates[:, 2 * H:3 * H])
    o_g = jax.nn.sigmoid(gates[:, 3 * H:4 * H])

    c_new = f_g * c_ref[...] + i_g * g_g
    h_new = o_g * jnp.tanh(c_new)

    # lane-dense (B, 2H) = (8, 128) store: h in lanes [0:H), c in lanes [H:2H)
    out_ref[...] = jnp.concatenate([h_new, c_new], axis=1).astype(out_ref.dtype)


def _vmem_spec():
    return pl.BlockSpec(memory_space=pltpu.MemorySpace.VMEM)


def lstm_step_pallas(ids2d, h0, c0, w_fused, b_fused):
    B, H = h0.shape
    VPH = w_fused.shape[0]
    flops = 2 * B * VPH * (4 * H)
    transcendentals = 5 * B * H
    bytes_accessed = 4 * (w_fused.size + b_fused.size + h0.size + c0.size
                          + ids2d.size + B * 2 * H)
    hc_new = pl.pallas_call(
        decoder_step_kernel,
        out_shape=jax.ShapeDtypeStruct((B, 2 * H), jnp.float32),
        in_specs=[_vmem_spec()] * 5,
        out_specs=_vmem_spec(),
        cost_estimate=pl.CostEstimate(
            flops=flops,
            transcendentals=transcendentals,
            bytes_accessed=bytes_accessed),
    )(ids2d, h0, c0, w_fused, b_fused)
    return hc_new


# ------------------------------- wrapper --------------------------------------
def decoder_forward(x_idx, hidden, cell, params):
    """Mirrors Decoder.forward(x, hidden, cell). Minimal wrapper glue."""
    B = x_idx.shape[0]
    ids2d = x_idx.astype(jnp.int32).reshape(B, 1)
    h0 = hidden[0]                                   # (B, H)
    c0 = cell[0]                                     # (B, H)

    hc = lstm_step_pallas(ids2d, h0, c0, params["w_fused"], params["b_fused"])
    h_new = hc[:, :HIDDEN]
    c_new = hc[:, HIDDEN:]

    output = h_new[:, None, :]       # (B, 1, H)  batch_first, seq_len = 1
    hidden_out = h_new[None, :, :]   # (n_layers=1, B, H)
    cell_out = c_new[None, :, :]     # (n_layers=1, B, H)
    return output, hidden_out, cell_out


# ------------------------------ params / ref ----------------------------------
def init_params(key):
    ks = jax.random.split(key, 5)
    scale = 1.0 / np.sqrt(HIDDEN)
    raw = {
        "embed": jax.random.normal(ks[0], (VOCAB, EMBED), jnp.float32) * 0.1,
        "w_ih": jax.random.uniform(ks[1], (4 * HIDDEN, EMBED), jnp.float32,
                                   -scale, scale),
        "w_hh": jax.random.uniform(ks[2], (4 * HIDDEN, HIDDEN), jnp.float32,
                                   -scale, scale),
        "b_ih": jax.random.uniform(ks[3], (4 * HIDDEN,), jnp.float32,
                                   -scale, scale),
        "b_hh": jax.random.uniform(ks[4], (4 * HIDDEN,), jnp.float32,
                                   -scale, scale),
    }
    # --- one-time weight prep, hoisted out of the per-step forward path -------
    embed64 = np.zeros((VOCAB_PAD, EMBED), np.float64)
    embed64[:VOCAB] = np.asarray(raw["embed"], np.float64)
    w_ih64 = np.asarray(raw["w_ih"], np.float64)          # (4H, E)
    w_hh64 = np.asarray(raw["w_hh"], np.float64)          # (4H, H)
    w_voc = embed64 @ w_ih64.T                            # (VOCAB_PAD, 4H)
    w_fused = np.concatenate([w_voc, w_hh64.T], axis=0).astype(np.float32)
    b_fused = (np.asarray(raw["b_ih"], np.float64)
               + np.asarray(raw["b_hh"], np.float64)).astype(np.float32)[None, :]
    raw["w_fused"] = jnp.asarray(w_fused)                 # (VOCAB_PAD + H, 4H)
    raw["b_fused"] = jnp.asarray(b_fused)                 # (1, 4H)
    return raw


def _reference_forward(x_idx, hidden, cell, params):
    """Pure NumPy float64 reference of the PyTorch LSTM single step."""
    x_idx = np.asarray(x_idx)
    embed = np.asarray(params["embed"], np.float64)
    w_ih = np.asarray(params["w_ih"], np.float64)
    w_hh = np.asarray(params["w_hh"], np.float64)
    b_ih = np.asarray(params["b_ih"], np.float64)
    b_hh = np.asarray(params["b_hh"], np.float64)
    h0 = np.asarray(hidden, np.float64)[0]
    c0 = np.asarray(cell, np.float64)[0]

    x_emb = embed[x_idx]                                  # (B, E)
    gates = x_emb @ w_ih.T + b_ih + h0 @ w_hh.T + b_hh
    H = HIDDEN

    def sig(v):
        return 1.0 / (1.0 + np.exp(-v))

    i_g = sig(gates[:, 0 * H:1 * H])
    f_g = sig(gates[:, 1 * H:2 * H])
    g_g = np.tanh(gates[:, 2 * H:3 * H])
    o_g = sig(gates[:, 3 * H:4 * H])
    c_new = f_g * c0 + i_g * g_g
    h_new = o_g * np.tanh(c_new)
    return h_new[:, None, :], h_new[None], c_new[None]


# --------------------------------- main ---------------------------------------
if __name__ == "__main__":
    key = jax.random.PRNGKey(0)
    pkey, xkey, hkey, ckey = jax.random.split(key, 4)
    params = init_params(pkey)

    x = jax.random.randint(xkey, (BATCH,), 0, VOCAB, dtype=jnp.int32)
    hidden = jax.random.normal(hkey, (N_LAYERS, BATCH, HIDDEN), jnp.float32) * 0.1
    cell = jax.random.normal(ckey, (N_LAYERS, BATCH, HIDDEN), jnp.float32) * 0.1

    fwd = jax.jit(decoder_forward)
    out, h_out, c_out = jax.block_until_ready(fwd(x, hidden, cell, params))

    ref_out, ref_h, ref_c = _reference_forward(x, hidden, cell, params)
    np.testing.assert_allclose(np.asarray(out), ref_out, rtol=1e-4, atol=1e-4)
    np.testing.assert_allclose(np.asarray(h_out), ref_h, rtol=1e-4, atol=1e-4)
    np.testing.assert_allclose(np.asarray(c_out), ref_c, rtol=1e-4, atol=1e-4)

    assert out.shape == (BATCH, 1, HIDDEN)
    assert h_out.shape == (N_LAYERS, BATCH, HIDDEN)
    assert c_out.shape == (N_LAYERS, BATCH, HIDDEN)
    print("KERNEL_OK")
</pallas_src>

<mosaic_0001>
module attributes {stable_mosaic.version = 11 : i64} {
  func.func @decoder_step_kernel(%arg0: memref<8x1xi32, #tpu.memory_space<vmem>>, %arg1: memref<8x64xf32, #tpu.memory_space<vmem>>, %arg2: memref<8x64xf32, #tpu.memory_space<vmem>>, %arg3: memref<128x256xf32, #tpu.memory_space<vmem>>, %arg4: memref<1x256xf32, #tpu.memory_space<vmem>>, %arg5: memref<8x128xf32, #tpu.memory_space<vmem>>) attributes {dimension_semantics = [], scalar_prefetch = 0 : i64, scratch_operands = 0 : i64, tpu.core_type = #tpu.core_type<tc>} {
    %0 = tpu.iota {dimensions = array<i32: 1>} : vector<8x64xi32>
    %c0 = arith.constant 0 : index
    %c0_0 = arith.constant 0 : index
    %1 = vector.load %arg0[%c0, %c0_0] : memref<8x1xi32, #tpu.memory_space<vmem>>, vector<8x1xi32>
    %2 = vector.broadcast %1 : vector<8x1xi32> to vector<8x64xi32>
    %3 = arith.cmpi eq, %0, %2 : vector<8x64xi32>
    %4 = arith.extui %3 : vector<8x64xi1> to vector<8x64xi32>
    %5 = arith.sitofp %4 : vector<8x64xi32> to vector<8x64xf32>
    %c0_1 = arith.constant 0 : index
    %c0_2 = arith.constant 0 : index
    %6 = vector.load %arg1[%c0_1, %c0_2] : memref<8x64xf32, #tpu.memory_space<vmem>>, vector<8x64xf32>
    %7 = tpu.concatenate %5, %6 in 1 : vector<8x64xf32>, vector<8x64xf32> -> vector<8x128xf32>
    %c0_3 = arith.constant 0 : index
    %c0_4 = arith.constant 0 : index
    %8 = vector.load %arg3[%c0_3, %c0_4] : memref<128x256xf32, #tpu.memory_space<vmem>>, vector<128x256xf32>
    %cst = arith.constant dense<0.000000e+00> : vector<8x256xf32>
    %9 = tpu.matmul %7, %8, %cst {dimension_numbers = #tpu.dot_dimension_numbers<[1], [0], [0], [1], [0, 0, 1, 1], [], []>} : vector<8x128xf32>, vector<128x256xf32>, vector<8x256xf32> -> vector<8x256xf32>
    %c0_5 = arith.constant 0 : index
    %c0_6 = arith.constant 0 : index
    %10 = vector.load %arg4[%c0_5, %c0_6] : memref<1x256xf32, #tpu.memory_space<vmem>>, vector<1x256xf32>
    %11 = vector.broadcast %10 : vector<1x256xf32> to vector<8x256xf32>
    %12 = arith.addf %9, %11 : vector<8x256xf32>
    %13 = vector.extract_strided_slice %12 {offsets = [0, 0], sizes = [8, 64], strides = [1, 1]} : vector<8x256xf32> to vector<8x64xf32>
    %14 = arith.negf %13 : vector<8x64xf32>
    %15 = math.exp %14 : vector<8x64xf32>
    %cst_7 = arith.constant 1.000000e+00 : f32
    %16 = vector.broadcast %cst_7 : f32 to vector<8x64xf32>
    %17 = arith.addf %16, %15 : vector<8x64xf32>
    %18 = arith.divf %16, %17 : vector<8x64xf32>
    %19 = vector.extract_strided_slice %12 {offsets = [0, 64], sizes = [8, 64], strides = [1, 1]} : vector<8x256xf32> to vector<8x64xf32>
    %20 = arith.negf %19 : vector<8x64xf32>
    %21 = math.exp %20 : vector<8x64xf32>
    %cst_8 = arith.constant 1.000000e+00 : f32
    %22 = vector.broadcast %cst_8 : f32 to vector<8x64xf32>
    %23 = arith.addf %22, %21 : vector<8x64xf32>
    %24 = arith.divf %22, %23 : vector<8x64xf32>
    %25 = vector.extract_strided_slice %12 {offsets = [0, 128], sizes = [8, 64], strides = [1, 1]} : vector<8x256xf32> to vector<8x64xf32>
    %26 = math.tanh %25 : vector<8x64xf32>
    %27 = vector.extract_strided_slice %12 {offsets = [0, 192], sizes = [8, 64], strides = [1, 1]} : vector<8x256xf32> to vector<8x64xf32>
    %28 = arith.negf %27 : vector<8x64xf32>
    %29 = math.exp %28 : vector<8x64xf32>
    %cst_9 = arith.constant 1.000000e+00 : f32
    %30 = vector.broadcast %cst_9 : f32 to vector<8x64xf32>
    %31 = arith.addf %30, %29 : vector<8x64xf32>
    %32 = arith.divf %30, %31 : vector<8x64xf32>
    %c0_10 = arith.constant 0 : index
    %c0_11 = arith.constant 0 : index
    %33 = vector.load %arg2[%c0_10, %c0_11] : memref<8x64xf32, #tpu.memory_space<vmem>>, vector<8x64xf32>
    %34 = arith.mulf %24, %33 : vector<8x64xf32>
    %35 = arith.mulf %18, %26 : vector<8x64xf32>
    %36 = arith.addf %34, %35 : vector<8x64xf32>
    %37 = math.tanh %36 : vector<8x64xf32>
    %38 = arith.mulf %32, %37 : vector<8x64xf32>
    %39 = tpu.concatenate %38, %36 in 1 : vector<8x64xf32>, vector<8x64xf32> -> vector<8x128xf32>
    %c0_12 = arith.constant 0 : index
    %c0_13 = arith.constant 0 : index
    %40 = vector.load %arg5[%c0_12, %c0_13] : memref<8x128xf32, #tpu.memory_space<vmem>>, vector<8x128xf32>
    tpu.vector_store %arg5[%c0_12, %c0_13], %39 {strides = array<i32>} : memref<8x128xf32, #tpu.memory_space<vmem>>, vector<8x128xf32>,
    return
  }
}

</mosaic_0001>

<llo_original>
// kernel: decoder_forward.1
$region0: #{decoder_forward.1}
  #allocation0 [shape = 'u32[]', space=smem, size = 0x4, offset = 0x4, fixed_abs, tag = 'smem constant byte address 0x4 - core index']
  #allocation1 [shape = 'u32[72,128]{1,0:T(1,128)}', space=vmem, size = 0x9000, scoped, tag = 'internal scratch']
  %s0 = inlined_call_operand.vmem [shape: s32[8,1], index: 0, kind: input, shape index: {}]
  %s1 = inlined_call_operand.vmem [shape: f32[8,64], index: 1, kind: input, shape index: {}]
  %s2 = inlined_call_operand.hbm [shape: f32[8,64], index: 2, kind: input, shape index: {}]
  %s3 = inlined_call_operand.hbm [shape: f32[128,256], index: 3, kind: input, shape index: {}]
  %s4 = inlined_call_operand.vmem [shape: f32[1,256], index: 4, kind: input, shape index: {}]
  %s5 = inlined_call_operand.vmem [shape: f32[8,128], index: 5, kind: output, shape index: {}]
  %s6 = sld [smem:[#allocation0]]
  $region38: #{decoder_forward.1} parent=0
    _
  %s8 = ssub.s32 1, %s6
  %s9 = scalar_select 0, %s8, %s6
  $region1: #{decoder_forward.1} parent=0
    #allocation2 [shape = 'u8[4096]{0}', space=vmem, size = 0x1000, scoped, tag = 'input window, operand 2, single buffered']
    #allocation3 [shape = 's32[1]{0}', space=sflag, size = 0x4, scoped, tag = 'scoped memory for decoder_forward.1']
    #allocation4 [shape = 'u8[131072]{0}', space=vmem, size = 0x20000, scoped, tag = 'input window, operand 3, single buffered']
    #allocation5 [shape = 's32[1]{0}', space=sflag, size = 0x4, scoped, tag = 'scoped memory for decoder_forward.1']
    %10 = vsyncpa [#allocation3], 0
    %11 = vsyncpa [#allocation5], 0
    // Predicated region
    $region2: #{decoder_forward.1} parent=1 // pred_check
      _
    $region3: #{decoder_forward.1} parent=1 // pred_check_branch
      %13 = sbr.rel (0) target = $region5
    $region4: #{decoder_forward.1} parent=1 // pred_region
      _
    $region5: #{decoder_forward.1} parent=1 // pred_fallthru
      _
    // Predicated region
    $region6: #{decoder_forward.1} parent=1 // pred_check
      _
    $region7: #{decoder_forward.1} parent=1 // pred_check_branch
      %15 = sbr.rel (0) target = $region9
    $region8: #{decoder_forward.1} parent=1 // pred_region
      _
    $region9: #{decoder_forward.1} parent=1 // pred_fallthru
      _
    // Predicated region
    $region10: #{decoder_forward.1} parent=1 // pred_check
      _
    $region11: #{decoder_forward.1} parent=1 // pred_check_branch
      %17 = sbr.rel (0) target = $region13
    $region12: #{decoder_forward.1} parent=1 // pred_region
      %19 = vsyncadd [#allocation3], 0
      %s21 = sshll.u32 %s2, 4
      %s22 = int_to_ptr.hbm [resolvable:$true] %s21
      %s23 = sshll.u32 [#allocation2], 4
      %s24 = int_to_ptr.vmem [resolvable:$true] %s23
      %26 = dma.hbm_to_vmem [thread:$0]  %s22, 128, %s24, [#allocation3]
    $region13: #{decoder_forward.1} parent=1 // pred_fallthru
      _
    // Predicated region
    $region14: #{decoder_forward.1} parent=1 // pred_check
      _
    $region15: #{decoder_forward.1} parent=1 // pred_check_branch
      %28 = sbr.rel (0) target = $region17
    $region16: #{decoder_forward.1} parent=1 // pred_region
      %30 = vsyncadd [#allocation5], 0
      %s31 = sshll.u32 %s3, 4
      %s32 = int_to_ptr.hbm [resolvable:$true] %s31
      %s33 = sshll.u32 [#allocation4], 4
      %s34 = int_to_ptr.vmem [resolvable:$true] %s33
      %39 = dma.hbm_to_vmem [thread:$0]  %s32, 4096, %s34, [#allocation5], 256, 256, 16
    $region17: #{decoder_forward.1} parent=1 // pred_fallthru
      _
    // Predicated region
    $region18: #{decoder_forward.1} parent=1 // pred_check
      _
    $region19: #{decoder_forward.1} parent=1 // pred_check_branch
      %41 = sbr.rel (0) target = $region21
    $region20: #{decoder_forward.1} parent=1 // pred_region
      _
    $region21: #{decoder_forward.1} parent=1 // pred_fallthru
      _
    // Predicated region
    $region22: #{decoder_forward.1} parent=1 // pred_check
      _
    $region23: #{decoder_forward.1} parent=1 // pred_check_branch
      %43 = sbr.rel (0) target = $region25
    $region24: #{decoder_forward.1} parent=1 // pred_region
      %45 = dma.done [#allocation3], 128
    $region25: #{decoder_forward.1} parent=1 // pred_fallthru
      _
    // Predicated region
    $region26: #{decoder_forward.1} parent=1 // pred_check
      _
    $region27: #{decoder_forward.1} parent=1 // pred_check_branch
      %47 = sbr.rel (0) target = $region29
    $region28: #{decoder_forward.1} parent=1 // pred_region
      %49 = dma.done [#allocation5], 4096
    $region29: #{decoder_forward.1} parent=1 // pred_fallthru
      _
    %v50 = vlaneseq
    %v51 = vand.u32 %v50, 127
    %v52 = vld [vmem:[%s0] sm:$0xff]
    %53 = vset.pattern.permute.xlu0 0
    %54 = vperm.xlu0 %53, %v52
    %v55 = vpop.permute.xlu0 %54
    %vm56 = vcmp.eq.s32.totalorder %v51, %v55
    %v57 = vsel %vm56, 1, 0
    %v58 = vcvt.s32.f32 %v57
    %v59 = vld [vmem:[%s1] sm:$0xff]
    %61 = vrot.lane.b32.xlu0 %v59, 64
    %v62 = vpop.permute.xlu0 %61
    %vm64 = vcmask 523264
    %v65 = vsel %vm64, %v58, %v62
    %v66 = vld [vmem:[#allocation4] sm:$0xff]
    %v67 = vld [vmem:[#allocation4 + $0x8] sm:$0xff]
    %v68 = vld [vmem:[#allocation4 + $0x10] sm:$0xff]
    %v69 = vld [vmem:[#allocation4 + $0x18] sm:$0xff]
    %v70 = vld [vmem:[#allocation4 + $0x20] sm:$0xff]
    %v71 = vld [vmem:[#allocation4 + $0x28] sm:$0xff]
    %v72 = vld [vmem:[#allocation4 + $0x30] sm:$0xff]
    %v73 = vld [vmem:[#allocation4 + $0x38] sm:$0xff]
    %v74 = vld [vmem:[#allocation4 + $0x40] sm:$0xff]
    %v75 = vld [vmem:[#allocation4 + $0x48] sm:$0xff]
    %v76 = vld [vmem:[#allocation4 + $0x50] sm:$0xff]
    %v77 = vld [vmem:[#allocation4 + $0x58] sm:$0xff]
    %v78 = vld [vmem:[#allocation4 + $0x60] sm:$0xff]
    %v79 = vld [vmem:[#allocation4 + $0x68] sm:$0xff]
    %v80 = vld [vmem:[#allocation4 + $0x70] sm:$0xff]
    %v81 = vld [vmem:[#allocation4 + $0x78] sm:$0xff]
    %v82 = vld [vmem:[#allocation4 + $0x80] sm:$0xff]
    %v83 = vld [vmem:[#allocation4 + $0x88] sm:$0xff]
    %v84 = vld [vmem:[#allocation4 + $0x90] sm:$0xff]
    %v85 = vld [vmem:[#allocation4 + $0x98] sm:$0xff]
    %v86 = vld [vmem:[#allocation4 + $0xa0] sm:$0xff]
    %v87 = vld [vmem:[#allocation4 + $0xa8] sm:$0xff]
    %v88 = vld [vmem:[#allocation4 + $0xb0] sm:$0xff]
    %v89 = vld [vmem:[#allocation4 + $0xb8] sm:$0xff]
    %v90 = vld [vmem:[#allocation4 + $0xc0] sm:$0xff]
    %v91 = vld [vmem:[#allocation4 + $0xc8] sm:$0xff]
    %v92 = vld [vmem:[#allocation4 + $0xd0] sm:$0xff]
    %v93 = vld [vmem:[#allocation4 + $0xd8] sm:$0xff]
    %v94 = vld [vmem:[#allocation4 + $0xe0] sm:$0xff]
    %v95 = vld [vmem:[#allocation4 + $0xe8] sm:$0xff]
    %v96 = vld [vmem:[#allocation4 + $0xf0] sm:$0xff]
    %v97 = vld [vmem:[#allocation4 + $0xf8] sm:$0xff]
    %v98 = vld [vmem:[%s4] sm:$0x3]
    %v100 = vperm.slane %v98, 0
    %v101 = vperm.slane %v98, 1
    %104 = vmatpush.msra.mxu0 %v96
    %105 = vmatpush.msra.mxu0 %v94
    %106 = vmatpush.msra.mxu0 %v92
    %107 = vmatpush.msra.mxu0 %v90
    %108 = vmatpush.msra.mxu0 %v88
    %109 = vmatpush.msra.mxu0 %v86
    %110 = vmatpush.msra.mxu0 %v84
    %111 = vmatpush.msra.mxu0 %v82
    %112 = vmatpush.msra.mxu0 %v80
    %113 = vmatpush.msra.mxu0 %v78
    %114 = vmatpush.msra.mxu0 %v76
    %115 = vmatpush.msra.mxu0 %v74
    %116 = vmatpush.msra.mxu0 %v72
    %117 = vmatpush.msra.mxu0 %v70
    %118 = vmatpush.msra.mxu0 %v68
    %119 = vmatpush.msra.mxu0 %v66
    %120 = vmatmul.f32.gmra.mxu0 %v65
    %v121 = vpop.f32.mrf.mxu0
    %v122 = vadd.f32 %v100, %v121
    %123 = vdwg.mxu0
    %124 = vmatpush.msra.mxu0 %v97
    %125 = vmatpush.msra.mxu0 %v95
    %126 = vmatpush.msra.mxu0 %v93
    %127 = vmatpush.msra.mxu0 %v91
    %128 = vmatpush.msra.mxu0 %v89
    %129 = vmatpush.msra.mxu0 %v87
    %130 = vmatpush.msra.mxu0 %v85
    %131 = vmatpush.msra.mxu0 %v83
    %132 = vmatpush.msra.mxu0 %v81
    %133 = vmatpush.msra.mxu0 %v79
    %134 = vmatpush.msra.mxu0 %v77
    %135 = vmatpush.msra.mxu0 %v75
    %136 = vmatpush.msra.mxu0 %v73
    %137 = vmatpush.msra.mxu0 %v71
    %138 = vmatpush.msra.mxu0 %v69
    %139 = vmatpush.msra.mxu0 %v67
    %140 = vmatmul.f32.gmra.mxu0 %v65
    %v141 = vpop.f32.mrf.mxu0
    %v142 = vadd.f32 %v101, %v141
    %143 = vdwg.mxu0
    %v144 = vxor.u32 %v122, 2147483648
    %v145 = vmul.f32 %v144, 1.442695
    %v146 = vpow.pop %v145
    %v147 = vadd.f32 %v146, 1.0
    %v148 = vrcp.pop %v147
    %v149 = vmul.f32 %v147, %v148
    %v150 = vsub.f32 1.0, %v149
    %v151 = vmul.f32 %v148, %v150
    %v152 = vadd.f32 %v148, %v151
    %vm153 = vweird.f32 %v147
    %vm154 = vweird.f32 %v148
    %vm155 = vmor %vm153, %vm154
    %v156 = vsel %vm155, %v148, %v152
    %v157 = vand.u32 2147483647, %v147
    %vm158 = vcmp.eq.f32.partialorder %v157, 8.507059e+37
    %v159 = vand.u32 %v147, 2147483648
    %v160 = vor.u32 1.1754944e-38, %v159
    %v161 = vsel %vm158, %v160, %v156
    %v162 = vmul.f32 1.0, %v161
    %v163 = vtanh.pop %v142
    %v164 = vxor.u32 %v142, 2147483648
    %v165 = vmul.f32 %v164, 1.442695
    %v166 = vpow.pop %v165
    %v167 = vadd.f32 %v166, 1.0
    %v168 = vrcp.pop %v167
    %v169 = vmul.f32 %v167, %v168
    %v170 = vsub.f32 1.0, %v169
    %v171 = vmul.f32 %v168, %v170
    %v172 = vadd.f32 %v168, %v171
    %vm173 = vweird.f32 %v167
    %vm174 = vweird.f32 %v168
    %vm175 = vmor %vm173, %vm174
    %v176 = vsel %vm175, %v168, %v172
    %v177 = vand.u32 2147483647, %v167
    %vm178 = vcmp.eq.f32.partialorder %v177, 8.507059e+37
    %v179 = vand.u32 %v167, 2147483648
    %v180 = vor.u32 1.1754944e-38, %v179
    %v181 = vsel %vm178, %v180, %v176
    %v182 = vmul.f32 1.0, %v181
    %v183 = vld [vmem:[#allocation2] sm:$0xff]
    %185 = vrot.lane.b32.xlu0 %v183, 64
    %v186 = vpop.permute.xlu0 %185
    %v188 = vmul.f32 %v162, %v186
    %v189 = vmul.f32 %v162, %v163
    %191 = vrot.lane.b32.xlu0 %v189, 64
    %v192 = vpop.permute.xlu0 %191
    %v194 = vadd.f32 %v188, %v192
    %v195 = vtanh.pop %v194
    %v196 = vmul.f32 %v182, %v195
    %198 = vrot.lane.b32.xlu0 %v196, 64
    %v199 = vpop.permute.xlu0 %198
    %v201 = vsel %vm64, %v199, %v194
    %202 = vst [vmem:[%s5] sm:$0xff] %v201
    // Predicated region
    $region30: #{decoder_forward.1} parent=1 // pred_check
      _
    $region31: #{decoder_forward.1} parent=1 // pred_check_branch
      %204 = sbr.rel (0) target = $region33
    $region32: #{decoder_forward.1} parent=1 // pred_region
      _
    $region33: #{decoder_forward.1} parent=1 // pred_fallthru
      _
    // Predicated region
    $region34: #{decoder_forward.1} parent=1 // pred_check
      _
    $region35: #{decoder_forward.1} parent=1 // pred_check_branch
      %206 = sbr.rel (0) target = $region37
    $region36: #{decoder_forward.1} parent=1 // pred_region
      _
    $region37: #{decoder_forward.1} parent=1 // pred_fallthru
      _
    %207 = vsyncpa [#allocation3], 1
    %208 = vsyncpa [#allocation5], 1

</llo_original>
